<compile_context>
chip_gen: v5e
topology: v5e:2x2
jax: 0.10.0
libtpu: 0.0.40
codegen_flags: <defaults>
</compile_context>

<pallas_src>
import functools

import jax
import jax.numpy as jnp
from jax.experimental import pallas as pl
from jax.experimental.pallas import tpu as pltpu  # noqa: F401  (TPU backend)


def _fused_kernel(xt_ref, o_ref, *, dc):
    """xt_ref: (B, D*C) transposed+flattened x.   o_ref: (B, 4*D*C) output.

    out[:,    0:  dc] = tanh^3(xt)   rows [0, D)    of the (B, 4D, C) view
    out[:,   dc:2*dc] = 0            rows [D, 2D)   (the zeros-concat half)
    out[:, 2*dc:3*dc] = tanh^3(xt)   rows [2D, 3D)  (the cat((y, y)) duplicate)
    out[:, 3*dc:4*dc] = 0            rows [3D, 4D)
    """
    v = jnp.tanh(jnp.tanh(jnp.tanh(xt_ref[...])))
    # Zero-fill once (covers both zero regions), then store the live slabs.
    o_ref[...] = jnp.zeros_like(o_ref)
    o_ref[:, 0:dc] = v
    o_ref[:, 2 * dc:3 * dc] = v


@jax.jit
def model_forward(x):
    """x: (B, C, D) float32 -> (B, 4*D*C) float32 (matches PyTorch forward)."""
    B, C, D = x.shape
    dc = C * D

    # transpose(2, 1) of the tiny input + flatten to a 2D lane-dense shape.
    # This is the only layout op outside the kernel; under jit it compiles to
    # a single small copy feeding the Pallas custom call (one dispatch total).
    xt = jnp.transpose(x, (0, 2, 1)).reshape(B, dc)

    # No grid, no BlockSpec pipeline: the whole (tiny) arrays live in VMEM.
    return pl.pallas_call(
        functools.partial(_fused_kernel, dc=dc),
        out_shape=jax.ShapeDtypeStruct((B, 4 * dc), x.dtype),
    )(xt)


def _reference(x):
    """Pure-JAX replica of the PyTorch forward, for verification."""
    B = x.shape[0]
    a = jnp.zeros_like(x)
    y = jnp.concatenate([x, a], axis=-1)
    y = jnp.transpose(y, (0, 2, 1))
    y = jnp.tanh(y)
    y = jnp.tanh(y.reshape(y.shape[0], y.shape[1], -1))
    y = jnp.concatenate([y, y], axis=1)
    return jnp.tanh(y.reshape(B, -1))


if __name__ == "__main__":
    key = jax.random.PRNGKey(0)
    x = jax.random.normal(key, (2, 3, 4), dtype=jnp.float32)

    out = jax.block_until_ready(model_forward(x))
    ref = jax.block_until_ready(_reference(x))

    assert out.shape == (2, 48), out.shape
    assert jnp.allclose(out, ref, atol=1e-6, rtol=1e-6), float(
        jnp.max(jnp.abs(out - ref)))

    print("KERNEL_OK")
</pallas_src>

<mosaic_0001>
module attributes {stable_mosaic.version = 11 : i64} {
  func.func @_fused_kernel(%arg0: memref<2x12xf32, #tpu.memory_space<vmem>>, %arg1: memref<2x48xf32, #tpu.memory_space<vmem>>) attributes {dimension_semantics = [], scalar_prefetch = 0 : i64, scratch_operands = 0 : i64, tpu.core_type = #tpu.core_type<tc>} {
    %c0 = arith.constant 0 : index
    %c0_0 = arith.constant 0 : index
    %0 = vector.load %arg0[%c0, %c0_0] : memref<2x12xf32, #tpu.memory_space<vmem>>, vector<2x12xf32>
    %1 = math.tanh %0 : vector<2x12xf32>
    %2 = math.tanh %1 : vector<2x12xf32>
    %3 = math.tanh %2 : vector<2x12xf32>
    %cst = arith.constant 0.000000e+00 : f32
    %4 = vector.broadcast %cst : f32 to vector<2x48xf32>
    %c0_1 = arith.constant 0 : index
    %c0_2 = arith.constant 0 : index
    %5 = vector.load %arg1[%c0_1, %c0_2] : memref<2x48xf32, #tpu.memory_space<vmem>>, vector<2x48xf32>
    tpu.vector_store %arg1[%c0_1, %c0_2], %4 {strides = array<i32>} : memref<2x48xf32, #tpu.memory_space<vmem>>, vector<2x48xf32>,
    %c0_3 = arith.constant 0 : index
    %c0_4 = arith.constant 0 : index
    %6 = vector.load %arg1[%c0_3, %c0_4] : memref<2x48xf32, #tpu.memory_space<vmem>>, vector<2x12xf32>
    tpu.vector_store %arg1[%c0_3, %c0_4], %3 {strides = array<i32>} : memref<2x48xf32, #tpu.memory_space<vmem>>, vector<2x12xf32>,
    %c0_5 = arith.constant 0 : index
    %c24 = arith.constant 24 : index
    %7 = vector.load %arg1[%c0_5, %c24] : memref<2x48xf32, #tpu.memory_space<vmem>>, vector<2x12xf32>
    tpu.vector_store %arg1[%c0_5, %c24], %3 {strides = array<i32>} : memref<2x48xf32, #tpu.memory_space<vmem>>, vector<2x12xf32>,
    return
  }
}

</mosaic_0001>

<llo_original>
// kernel: model_forward.1
$region0: #{model_forward.1}
  #allocation0 [shape = 'u32[]', space=smem, size = 0x4, offset = 0x4, fixed_abs, tag = 'smem constant byte address 0x4 - core index']
  #allocation1 [shape = 'u32[72,128]{1,0:T(1,128)}', space=vmem, size = 0x9000, scoped, tag = 'internal scratch']
  %s0 = inlined_call_operand.vmem [shape: f32[2,12], index: 0, kind: input, shape index: {}]
  %s1 = inlined_call_operand.hbm [shape: f32[2,48], index: 1, kind: output, shape index: {}]
  %s2 = sld [smem:[#allocation0]]
  $region14: #{model_forward.1} parent=0
    _
  %s4 = ssub.s32 1, %s2
  %s5 = scalar_select 0, %s4, %s2
  $region1: #{model_forward.1} parent=0
    #allocation2 [shape = 'u8[1024]{0}', space=vmem, size = 0x400, scoped, tag = 'output window, operand 0, single buffered']
    #allocation3 [shape = 's32[1]{0}', space=sflag, size = 0x4, scoped, tag = 'scoped memory for model_forward.1']
    %6 = vsyncpa [#allocation3], 0
    // Predicated region
    $region2: #{model_forward.1} parent=1 // pred_check
      _
    $region3: #{model_forward.1} parent=1 // pred_check_branch
      %8 = sbr.rel (0) target = $region5
    $region4: #{model_forward.1} parent=1 // pred_region
      _
    $region5: #{model_forward.1} parent=1 // pred_fallthru
      _
    %v9 = vld [vmem:[%s0] sm:$0x3]
    %v10 = vtanh.pop %v9
    %v11 = vtanh.pop %v10
    %v12 = vtanh.pop %v11
    %vm13 = vcmask 386048
    %14 = vst.msk [vmem:[#allocation2] sm:$0x3] %vm13, 0.0
    %vm15 = vcmask 91136
    %16 = vst.msk [vmem:[#allocation2] sm:$0x3] %vm15, %v12
    %18 = vrot.lane.b32.xlu0 %v12, 24
    %v19 = vpop.permute.xlu0 %18
    %vm21 = vcmask 287936
    %22 = vst.msk [vmem:[#allocation2] sm:$0x3] %vm21, %v19
    // Predicated region
    $region6: #{model_forward.1} parent=1 // pred_check
      _
    $region7: #{model_forward.1} parent=1 // pred_check_branch
      %24 = sbr.rel (0) target = $region9
    $region8: #{model_forward.1} parent=1 // pred_region
      %26 = vsyncadd [#allocation3], 0
      %s28 = sshll.u32 [#allocation2], 4
      %s29 = int_to_ptr.vmem [resolvable:$true] %s28
      %s30 = sshll.u32 %s1, 4
      %s31 = int_to_ptr.hbm [resolvable:$true] %s30
      %33 = dma.vmem_to_hbm [thread:$0]  %s29, 32, %s31, [#allocation3]
    $region9: #{model_forward.1} parent=1 // pred_fallthru
      _
    // Predicated region
    $region10: #{model_forward.1} parent=1 // pred_check
      _
    $region11: #{model_forward.1} parent=1 // pred_check_branch
      %35 = sbr.rel (0) target = $region13
    $region12: #{model_forward.1} parent=1 // pred_region
      %37 = dma.done [#allocation3], 32
    $region13: #{model_forward.1} parent=1 // pred_fallthru
      _
    %38 = vsyncpa [#allocation3], 1

</llo_original>
